<compile_context>
chip_gen: v7x
topology: tpu7x:2x2x1
jax: 0.10.0
libtpu: 0.0.40
codegen_flags: <defaults>
</compile_context>

<pallas_src>
import math
import functools

import jax
import jax.numpy as jnp
from jax.experimental import pallas as pl
from jax.experimental.pallas import tpu as pltpu


# --------------------------------------------------------------------------
# Parameter (buffer) construction — plain JAX glue, mirrors __init__ exactly.
# --------------------------------------------------------------------------
def make_pe_buffer(max_len: int, d_model: int) -> jnp.ndarray:
    position = jnp.arange(max_len, dtype=jnp.float32)[:, None]          # (L, 1)
    div_term = jnp.exp(
        jnp.arange(0, d_model, 2, dtype=jnp.float32)
        * (-math.log(10000.0) / d_model)
    )                                                                    # (D/2,)
    pe = jnp.zeros((max_len, d_model), dtype=jnp.float32)
    pe = pe.at[:, 0::2].set(jnp.sin(position * div_term))
    pe = pe.at[:, 1::2].set(jnp.cos(position * div_term))
    # torch: pe.unsqueeze(0).transpose(0, 1) -> (max_len, 1, d_model)
    return pe[:, None, :]


# --------------------------------------------------------------------------
# Kernels
# --------------------------------------------------------------------------
def _add_pe_kernel(x_ref, pe_ref, o_ref):
    # x_ref: (tS, B, D); pe_ref: (tS, 1, D) -> broadcast over B
    o_ref[...] = (x_ref[...] + pe_ref[...]).astype(o_ref.dtype)


def _add_pe_dropout_kernel(x_ref, pe_ref, bits_ref, o_ref, *,
                           threshold: int, scale: float):
    y = x_ref[...] + pe_ref[...]
    # inverted dropout: keep iff bits >= p * 2^32  (prob 1-p), scale kept by 1/(1-p)
    keep = bits_ref[...] >= jnp.uint32(threshold)
    y = jnp.where(keep, y * jnp.asarray(scale, y.dtype), jnp.zeros_like(y))
    o_ref[...] = y.astype(o_ref.dtype)


# --------------------------------------------------------------------------
# Tiling choice: keep each pipelined buffer <= ~4 MiB so that double-buffered
# x + bits + out (+ small pe) stays well under the scoped-VMEM default on
# every generation (16 MiB v5e / 32 MiB v6e / 32 MiB v7x).
# --------------------------------------------------------------------------
def _choose_tile_s(S: int, B: int, D: int, itemsize: int,
                   per_buffer_bytes: int = 4 * 1024 * 1024) -> int:
    rows = per_buffer_bytes // max(1, B * D * itemsize)
    rows = max(1, rows)
    if rows >= 8:
        rows = (rows // 8) * 8
    return int(min(S, rows))


# --------------------------------------------------------------------------
# Wrapper
# --------------------------------------------------------------------------
def positional_encoding(x, pe_buffer, *, p: float = 0.1,
                        training: bool = True, seed: int = 0):
    """x: [S, B, D]; pe_buffer: [max_len, 1, D] (from make_pe_buffer)."""
    S, B, D = x.shape
    pe = pe_buffer[:S].astype(x.dtype)                       # (S, 1, D)

    tS = _choose_tile_s(S, B, D, x.dtype.itemsize)
    grid = (pl.cdiv(S, tS),)

    # NOTE: for real workloads B should be >= 8 and D a multiple of 128 to
    # avoid sublane/lane padding; the block last-two dims here are the full
    # (B, D) extents so any shape is still legal.
    x_spec = pl.BlockSpec((tS, B, D), lambda i: (i, 0, 0))
    pe_spec = pl.BlockSpec((tS, 1, D), lambda i: (i, 0, 0))
    out_spec = pl.BlockSpec((tS, B, D), lambda i: (i, 0, 0))

    cparams = pltpu.CompilerParams(
        dimension_semantics=("parallel",),          # v7x: both TCs share the S loop
        vmem_limit_bytes=32 * 1024 * 1024,
    )

    if training and p > 0.0:
        key = jax.random.PRNGKey(seed)
        bits = jax.random.bits(key, (S, B, D), dtype=jnp.uint32)
        threshold = min(int(round(p * (2.0 ** 32))), 2 ** 32 - 1)
        kernel = functools.partial(_add_pe_dropout_kernel,
                                   threshold=threshold,
                                   scale=1.0 / (1.0 - p))
        return pl.pallas_call(
            kernel,
            out_shape=jax.ShapeDtypeStruct((S, B, D), x.dtype),
            grid=grid,
            in_specs=[x_spec, pe_spec, x_spec],      # bits tiled exactly like x
            out_specs=out_spec,
            input_output_aliases={0: 0},             # x -> out (same shape/dtype)
            compiler_params=cparams,
        )(x, pe, bits)

    return pl.pallas_call(
        _add_pe_kernel,
        out_shape=jax.ShapeDtypeStruct((S, B, D), x.dtype),
        grid=grid,
        in_specs=[x_spec, pe_spec],
        out_specs=out_spec,
        input_output_aliases={0: 0},
        compiler_params=cparams,
    )(x, pe)


# --------------------------------------------------------------------------
# Demo / self-check
# --------------------------------------------------------------------------
if __name__ == "__main__":
    d_model = 32
    max_len = 64
    seq_len = 8
    batch = 2
    p_drop = 0.1

    key = jax.random.PRNGKey(0)
    x = jax.random.normal(key, (seq_len, batch, d_model), dtype=jnp.float32)

    pe_buffer = make_pe_buffer(max_len, d_model)
    ref = x + pe_buffer[:seq_len]

    # eval-mode path (dropout disabled) — exact match against pure-JAX reference
    out_eval = positional_encoding(x, pe_buffer, p=p_drop, training=False)
    out_eval = jax.block_until_ready(out_eval)
    assert out_eval.shape == (seq_len, batch, d_model)
    assert jnp.allclose(out_eval, ref, atol=1e-6), "eval-mode mismatch"

    # train-mode path (inverted dropout with deterministic seed)
    out_train = positional_encoding(x, pe_buffer, p=p_drop, training=True, seed=0)
    out_train = jax.block_until_ready(out_train)
    assert out_train.shape == (seq_len, batch, d_model)
    kept = out_train != 0.0
    assert jnp.allclose(
        jnp.where(kept, out_train, 0.0),
        jnp.where(kept, ref / (1.0 - p_drop), 0.0),
        atol=1e-5,
    ), "train-mode dropout scaling mismatch"
    # at least one element kept (p=0.1, 512 elements -> overwhelmingly likely)
    assert bool(jnp.any(kept)), "dropout dropped everything"

    print("KERNEL_OK")
</pallas_src>

<mosaic_0001>
module attributes {stable_mosaic.version = 11 : i64} {
  func.func @_add_pe_kernel(%arg0: i32, %arg1: memref<8x2x32xf32, #tpu.memory_space<vmem>>, %arg2: memref<8x1x32xf32, #tpu.memory_space<vmem>>, %arg3: memref<8x2x32xf32, #tpu.memory_space<vmem>>) attributes {dimension_semantics = [#tpu.dimension_semantics<parallel>], iteration_bounds = array<i64: 1>, scalar_prefetch = 0 : i64, scratch_operands = 0 : i64, tpu.core_type = #tpu.core_type<tc>, window_params = [{transform_indices = @transform_0, window_bounds = array<i64: 8, 2, 32>}, {transform_indices = @transform_1, window_bounds = array<i64: 8, 1, 32>}, {transform_indices = @transform_2, window_bounds = array<i64: 8, 2, 32>}]} {
    %c0 = arith.constant 0 : index
    %c0_0 = arith.constant 0 : index
    %c0_1 = arith.constant 0 : index
    %0 = vector.load %arg1[%c0, %c0_0, %c0_1] : memref<8x2x32xf32, #tpu.memory_space<vmem>>, vector<8x2x32xf32>
    %c0_2 = arith.constant 0 : index
    %c0_3 = arith.constant 0 : index
    %c0_4 = arith.constant 0 : index
    %1 = vector.load %arg2[%c0_2, %c0_3, %c0_4] : memref<8x1x32xf32, #tpu.memory_space<vmem>>, vector<8x1x32xf32>
    %2 = vector.broadcast %1 : vector<8x1x32xf32> to vector<8x2x32xf32>
    %3 = arith.addf %0, %2 : vector<8x2x32xf32>
    %c0_5 = arith.constant 0 : index
    %c0_6 = arith.constant 0 : index
    %c0_7 = arith.constant 0 : index
    %4 = vector.load %arg3[%c0_5, %c0_6, %c0_7] : memref<8x2x32xf32, #tpu.memory_space<vmem>>, vector<8x2x32xf32>
    tpu.vector_store %arg3[%c0_5, %c0_6, %c0_7], %3 {strides = array<i32>} : memref<8x2x32xf32, #tpu.memory_space<vmem>>, vector<8x2x32xf32>,
    return
  }
  func.func @transform_0(%arg0: i32) -> (i32, i32, i32) {
    %c0_i32 = arith.constant 0 : i32
    %c0_i32_0 = arith.constant 0 : i32
    %c0_i32_1 = arith.constant 0 : i32
    return %arg0, %c0_i32, %c0_i32_0 : i32, i32, i32
  }
  func.func @transform_1(%arg0: i32) -> (i32, i32, i32) {
    %c0_i32 = arith.constant 0 : i32
    %c0_i32_0 = arith.constant 0 : i32
    %c0_i32_1 = arith.constant 0 : i32
    return %arg0, %c0_i32, %c0_i32_0 : i32, i32, i32
  }
  func.func @transform_2(%arg0: i32) -> (i32, i32, i32) {
    %c0_i32 = arith.constant 0 : i32
    %c0_i32_0 = arith.constant 0 : i32
    %c0_i32_1 = arith.constant 0 : i32
    return %arg0, %c0_i32, %c0_i32_0 : i32, i32, i32
  }
}

</mosaic_0001>

<llo_original>
// kernel: tpu_custom_call.1
$region0: #{tpu_custom_call.1}
  #allocation0 [shape = 'u32[]', space=smem, size = 0x4, offset = 0x4, fixed_abs, tag = 'smem constant byte address 0x4 - core index']
  #allocation1 [shape = 'u32[144,128]{1,0:T(1,128)}', space=vmem, size = 0x12000, scoped, tag = 'internal scratch']
  %s0 = inlined_call_operand.hbm [shape: f32[8,2,32], index: 0, kind: input, shape index: {}, may-alias: {0,2}]
  %s1 = inlined_call_operand.vmem [shape: f32[8,1,32], index: 1, kind: input, shape index: {}]
  %s2 = inlined_call_operand.hbm [shape: f32[8,2,32], index: 2, kind: output, shape index: {}, may-alias: {0,2}]
  %s3 = sld [smem:[#allocation0]]
  $region22: #{tpu_custom_call.1} parent=0
    _
  %s5 = ssub.s32 1, %s3
  %s6 = scalar_select 0, %s5, %s3
  $region1: #{tpu_custom_call.1} parent=0
    #allocation2 [shape = 'u8[8192]{0}', space=vmem, size = 0x2000, scoped, tag = 'input window, operand 0, single buffered']
    #allocation3 [shape = 's32[1]{0}', space=sflag, size = 0x4, scoped, tag = 'scoped memory for tpu_custom_call.1']
    #allocation4 [shape = 's32[1]{0}', space=sflag, size = 0x4, scoped, tag = 'scoped memory for tpu_custom_call.1']
    #allocation5 [shape = 'u8[8192]{0}', space=vmem, size = 0x2000, scoped, tag = 'output window, operand 0, single buffered']
    %7 = vsyncpa [#allocation3], 0
    %8 = vsyncpa [#allocation4], 0
    // Predicated region
    $region2: #{tpu_custom_call.1} parent=1 // pred_check
      _
    $region3: #{tpu_custom_call.1} parent=1 // pred_check_branch
      %10 = sbr.rel (0) target = $region5
    $region4: #{tpu_custom_call.1} parent=1 // pred_region
      %s12 = ssub.s32 256, 256
      %13 = vsyncadd [#allocation3], %s12
      %s14 = sshll.u32 [#allocation2], 4
      %s15 = int_to_ptr.vmem [resolvable:$true] %s14
      %20 = dma.hbm_to_vmem [thread:$0]  %s0, 256, %s15, [#allocation3], 32, 32, 2
    $region5: #{tpu_custom_call.1} parent=1 // pred_fallthru
      _
    // Predicated region
    $region6: #{tpu_custom_call.1} parent=1 // pred_check
      _
    $region7: #{tpu_custom_call.1} parent=1 // pred_check_branch
      %22 = sbr.rel (0) target = $region9
    $region8: #{tpu_custom_call.1} parent=1 // pred_region
      _
    $region9: #{tpu_custom_call.1} parent=1 // pred_fallthru
      _
    // Predicated region
    $region10: #{tpu_custom_call.1} parent=1 // pred_check
      _
    $region11: #{tpu_custom_call.1} parent=1 // pred_check_branch
      %24 = sbr.rel (0) target = $region13
    $region12: #{tpu_custom_call.1} parent=1 // pred_region
      %25 = dma.done [#allocation3], 256
    $region13: #{tpu_custom_call.1} parent=1 // pred_fallthru
      _
    %v26 = vld [vmem:[#allocation2] sm:$0x3]
    %v27 = vld [vmem:[#allocation2 + $0x2] sm:$0x3]
    %v28 = vld [vmem:[#allocation2 + $0x4] sm:$0x3]
    %v29 = vld [vmem:[#allocation2 + $0x6] sm:$0x3]
    %v30 = vld [vmem:[#allocation2 + $0x8] sm:$0x3]
    %v31 = vld [vmem:[#allocation2 + $0xa] sm:$0x3]
    %v32 = vld [vmem:[#allocation2 + $0xc] sm:$0x3]
    %v33 = vld [vmem:[#allocation2 + $0xe] sm:$0x3]
    %v34 = vld [vmem:[%s1] sm:$0x1]
    %v35 = vld [vmem:[%s1 + $0x1] sm:$0x1]
    %v36 = vld [vmem:[%s1 + $0x2] sm:$0x1]
    %v37 = vld [vmem:[%s1 + $0x3] sm:$0x1]
    %v38 = vld [vmem:[%s1 + $0x4] sm:$0x1]
    %v39 = vld [vmem:[%s1 + $0x5] sm:$0x1]
    %v40 = vld [vmem:[%s1 + $0x6] sm:$0x1]
    %v41 = vld [vmem:[%s1 + $0x7] sm:$0x1]
    %v50 = vlaneseq
    %v51 = vshrl.u32 %v50, 7
    %v52 = vsub.s32 0, %v51
    %v53 = vrot.slane %v34, %v52
    %v54 = vlaneseq
    %v55 = vshrl.u32 %v54, 7
    %v56 = vsub.s32 0, %v55
    %v57 = vrot.slane %v35, %v56
    %v58 = vlaneseq
    %v59 = vshrl.u32 %v58, 7
    %v60 = vsub.s32 0, %v59
    %v61 = vrot.slane %v36, %v60
    %v62 = vlaneseq
    %v63 = vshrl.u32 %v62, 7
    %v64 = vsub.s32 0, %v63
    %v65 = vrot.slane %v37, %v64
    %v66 = vlaneseq
    %v67 = vshrl.u32 %v66, 7
    %v68 = vsub.s32 0, %v67
    %v69 = vrot.slane %v38, %v68
    %v70 = vlaneseq
    %v71 = vshrl.u32 %v70, 7
    %v72 = vsub.s32 0, %v71
    %v73 = vrot.slane %v39, %v72
    %v74 = vlaneseq
    %v75 = vshrl.u32 %v74, 7
    %v76 = vsub.s32 0, %v75
    %v77 = vrot.slane %v40, %v76
    %v78 = vlaneseq
    %v79 = vshrl.u32 %v78, 7
    %v80 = vsub.s32 0, %v79
    %v81 = vrot.slane %v41, %v80
    %v90 = vadd.f32 %v26, %v53
    %v91 = vadd.f32 %v27, %v57
    %v92 = vadd.f32 %v28, %v61
    %v93 = vadd.f32 %v29, %v65
    %v94 = vadd.f32 %v30, %v69
    %v95 = vadd.f32 %v31, %v73
    %v96 = vadd.f32 %v32, %v77
    %v97 = vadd.f32 %v33, %v81
    %vm98 = vcmask 254976
    %99 = vst.msk [vmem:[#allocation5] sm:$0x3] %vm98, %v90
    %100 = vst.msk [vmem:[#allocation5 + $0x2] sm:$0x3] %vm98, %v91
    %101 = vst.msk [vmem:[#allocation5 + $0x4] sm:$0x3] %vm98, %v92
    %102 = vst.msk [vmem:[#allocation5 + $0x6] sm:$0x3] %vm98, %v93
    %103 = vst.msk [vmem:[#allocation5 + $0x8] sm:$0x3] %vm98, %v94
    %104 = vst.msk [vmem:[#allocation5 + $0xa] sm:$0x3] %vm98, %v95
    %105 = vst.msk [vmem:[#allocation5 + $0xc] sm:$0x3] %vm98, %v96
    %106 = vst.msk [vmem:[#allocation5 + $0xe] sm:$0x3] %vm98, %v97
    // Predicated region
    $region14: #{tpu_custom_call.1} parent=1 // pred_check
      _
    $region15: #{tpu_custom_call.1} parent=1 // pred_check_branch
      %108 = sbr.rel (0) target = $region17
    $region16: #{tpu_custom_call.1} parent=1 // pred_region
      %s110 = ssub.s32 256, 256
      %111 = vsyncadd [#allocation4], %s110
      %s112 = sshll.u32 [#allocation5], 4
      %s113 = int_to_ptr.vmem [resolvable:$true] %s112
      %118 = dma.vmem_to_hbm [thread:$0]  %s113, 256, %s2, [#allocation4], 32, 32, 2
    $region17: #{tpu_custom_call.1} parent=1 // pred_fallthru
      _
    // Predicated region
    $region18: #{tpu_custom_call.1} parent=1 // pred_check
      _
    $region19: #{tpu_custom_call.1} parent=1 // pred_check_branch
      %120 = sbr.rel (0) target = $region21
    $region20: #{tpu_custom_call.1} parent=1 // pred_region
      %121 = dma.done [#allocation4], 256
    $region21: #{tpu_custom_call.1} parent=1 // pred_fallthru
      _
    %122 = vsyncpa [#allocation3], 1
    %123 = vsyncpa [#allocation4], 1

</llo_original>
